<compile_context>
chip_gen: v7x
topology: tpu7x:2x2x1
jax: 0.10.0
libtpu: 0.0.40
codegen_flags: <defaults>
</compile_context>

<pallas_src>
import functools

import jax
import jax.numpy as jnp
import numpy as np
from jax.experimental import pallas as pl
from jax.experimental.pallas import tpu as pltpu

EPS = 1e-5  # torch.nn.GroupNorm default


def _round_up(x, m):
    return ((x + m - 1) // m) * m


def _resblock1d_kernel(x_ref, w_ref, p_ref, o_ref, *, c_real, l_real):
    B, Cp, Lp = x_ref.shape
    wv = w_ref[...]                       # (6, Cp, Cp) bf16: [w1 tap0..2, w2 tap0..2]
    pv = p_ref[...]                       # (6, Cp, 1)  f32 : [b1, g1, be1, b2, g2, be2]
    w1l, w1c, w1r = wv[0], wv[1], wv[2]   # hoisted static slices (free)
    w2l, w2c, w2r = wv[3], wv[4], wv[5]
    b1, g1, be1 = pv[0], pv[1], pv[2]
    b2, g2, be2 = pv[3], pv[4], pv[5]

    inv_count = 1.0 / float(c_real * l_real)
    pad_lanes = (l_real != Lp)
    lane = jax.lax.broadcasted_iota(jnp.int32, (1, Lp), 1)   # hoisted lane masks
    if pad_lanes:
        lane_valid = lane < l_real
    else:
        not_first = lane >= 1
        not_last = lane < (Lp - 1)

    def conv3(h, w_l, w_c, w_r, bias):
        # y[:, l] = w_l @ h[:, l-1] + w_c @ h[:, l] + w_r @ h[:, l+1]  (zero padded)
        hb = h.astype(jnp.bfloat16)
        yc = jnp.dot(w_c, hb, preferred_element_type=jnp.float32)
        # Roll the f32 tap products (XLU) instead of building shifted activation copies.
        y_prev = pltpu.roll(jnp.dot(w_l, hb, preferred_element_type=jnp.float32),
                            shift=1, axis=1)        # product at column l-1 -> column l
        y_next = pltpu.roll(jnp.dot(w_r, hb, preferred_element_type=jnp.float32),
                            shift=Lp - 1, axis=1)   # product at column l+1 -> column l
        if pad_lanes:
            # Wrap of y_prev is w_l @ h[:, Lp-1] == 0 (padded lanes of h are zero); the
            # wrap of y_next lands in a padded column, killed by the lane mask below,
            # which is also needed so padded lanes never pollute the GN statistics.
            return jnp.where(lane_valid, yc + y_prev + y_next + bias, 0.0)
        # Lane-aligned L: only the two wrap columns need masking.
        return (yc + jnp.where(not_first, y_prev, 0.0)
                   + jnp.where(not_last, y_next, 0.0) + bias)

    def groupnorm(h, gamma, beta):
        # GroupNorm(1, C): per-sample stats over the real (C, L) elements.  Padded
        # entries of h are exactly zero, so plain sums + real-count divide are exact.
        s1 = jnp.sum(h, axis=(0, 1), keepdims=True)
        s2 = jnp.sum(h * h, axis=(0, 1), keepdims=True)
        mean = s1 * inv_count
        var = jnp.maximum(s2 * inv_count - mean * mean, 0.0)  # clamp f32 cancellation
        scale = gamma * jax.lax.rsqrt(var + EPS)              # (Cp, 1)
        shift = beta - mean * scale                           # (Cp, 1)
        return h * scale + shift                              # 2 VPU ops / element

    # Static per-sample loop; B is kept small by the wrapper.
    for b in range(B):
        x = x_ref[b]                                          # (Cp, Lp) f32 residual
        h = conv3(x, w1l, w1c, w1r, b1)
        h = jnp.maximum(groupnorm(h, g1, be1), 0.0)
        if pad_lanes:
            h = jnp.where(lane_valid, h, 0.0)  # conv2's right edge needs zero padding
        h = groupnorm(conv3(h, w2l, w2c, w2r, b2), g2, be2)
        # Note: a fully padded (all-zero) batch sample hits var=0 and produces large
        # but finite values via rsqrt(EPS); those rows are sliced away by the wrapper.
        o_ref[b] = jnp.maximum(h + x, 0.0).astype(o_ref.dtype)


def resblock1d_pallas(x, params):
    """x: (N, C, L) float32. params: dict with torch-shaped weights."""
    N, C, L = x.shape
    Cp = _round_up(C, 16)      # bf16 sublane-pack aligned channel count
    Lp = _round_up(L, 128)     # lane-dense sequence length

    # Generation-aware block / VMEM sizing (v5e/v6e: 128 MiB VMEM, v7x: 64 MiB).
    try:
        vmem_cap = int(getattr(pltpu.get_tpu_info(), "vmem_capacity_bytes", 64 << 20))
    except Exception:
        vmem_cap = 64 << 20
    if vmem_cap > (96 << 20):
        block_budget, vmem_limit = 6 << 20, 100 << 20   # v5e / v6e (128 MiB parts)
    else:
        block_budget, vmem_limit = 2 << 20, 48 << 20    # v7x (64 MiB physical)

    per_sample_bytes = Cp * Lp * 4
    B = int(max(1, min(N, block_budget // per_sample_bytes)))
    if N >= 2:
        B = min(B, (N + 1) // 2)   # >= 2 grid steps so both v7x TensorCores get work
    B = min(B, 16)                 # bound the in-kernel unroll
    Np = _round_up(N, B)

    # Zero padding keeps padded samples/channels/lanes exactly zero through the conv
    # edges and the GroupNorm statistics.
    x_p = jnp.pad(x, ((0, Np - N), (0, Cp - C), (0, Lp - L)))

    def prep_w(w):  # torch (out, in, 3) -> (3, Cp, Cp) bf16, one 2-D matrix per tap
        wp = jnp.pad(w, ((0, Cp - C), (0, Cp - C), (0, 0))).astype(jnp.bfloat16)
        return jnp.stack([wp[:, :, 0], wp[:, :, 1], wp[:, :, 2]], axis=0)

    w_all = jnp.concatenate([prep_w(params["w1"]), prep_w(params["w2"])], axis=0)

    def pad_vec(v):
        return jnp.pad(v, (0, Cp - C)).reshape(Cp, 1).astype(jnp.float32)

    # One packed per-channel parameter tensor: [b1, g1, be1, b2, g2, be2].
    pvec = jnp.stack([pad_vec(params[k])
                      for k in ("b1", "g1", "be1", "b2", "g2", "be2")], axis=0)

    kernel = functools.partial(_resblock1d_kernel, c_real=C, l_real=L)

    out = pl.pallas_call(
        kernel,
        out_shape=jax.ShapeDtypeStruct((Np, Cp, Lp), x.dtype),
        grid=(Np // B,),
        in_specs=[
            pl.BlockSpec((B, Cp, Lp), lambda i: (i, 0, 0)),
            pl.BlockSpec((6, Cp, Cp), lambda i: (0, 0, 0)),
            pl.BlockSpec((6, Cp, 1), lambda i: (0, 0, 0)),
        ],
        out_specs=pl.BlockSpec((B, Cp, Lp), lambda i: (i, 0, 0)),
        compiler_params=pltpu.CompilerParams(
            dimension_semantics=("parallel",),
            vmem_limit_bytes=vmem_limit,
        ),
    )(x_p, w_all, pvec)

    return out[:N, :C, :L]


def resblock1d_ref(x, params):
    """Pure-JAX (f32) reference mirroring the PyTorch forward."""
    def conv(h, w, b):
        y = jax.lax.conv_general_dilated(
            h, w, window_strides=(1,), padding=[(1, 1)],
            dimension_numbers=("NCH", "OIH", "NCH"))
        return y + b[None, :, None]

    def gn(h, g, be):
        mean = h.mean(axis=(1, 2), keepdims=True)
        var = ((h - mean) ** 2).mean(axis=(1, 2), keepdims=True)
        return (h - mean) / jnp.sqrt(var + EPS) * g[None, :, None] + be[None, :, None]

    h = jax.nn.relu(gn(conv(x, params["w1"], params["b1"]), params["g1"], params["be1"]))
    h = gn(conv(h, params["w2"], params["b2"]), params["g2"], params["be2"])
    return jax.nn.relu(h + x)


def make_params(key, c):
    ks = jax.random.split(key, 8)
    bound = 1.0 / np.sqrt(c * 3)  # torch Conv1d default init range
    return {
        "w1": jax.random.uniform(ks[0], (c, c, 3), jnp.float32, -bound, bound),
        "b1": jax.random.uniform(ks[1], (c,), jnp.float32, -bound, bound),
        "w2": jax.random.uniform(ks[2], (c, c, 3), jnp.float32, -bound, bound),
        "b2": jax.random.uniform(ks[3], (c,), jnp.float32, -bound, bound),
        "g1": 1.0 + 0.1 * jax.random.normal(ks[4], (c,), jnp.float32),
        "be1": 0.1 * jax.random.normal(ks[5], (c,), jnp.float32),
        "g2": 1.0 + 0.1 * jax.random.normal(ks[6], (c,), jnp.float32),
        "be2": 0.1 * jax.random.normal(ks[7], (c,), jnp.float32),
    }


if __name__ == "__main__":
    N, C, L = 2, 4, 16
    key = jax.random.PRNGKey(0)
    kx, kp = jax.random.split(key)
    x = jax.random.normal(kx, (N, C, L), jnp.float32)
    params = make_params(kp, C)

    out = jax.block_until_ready(resblock1d_pallas(x, params))
    ref = jax.block_until_ready(resblock1d_ref(x, params))
    # Conv matmuls run with bf16 operands on the MXU (f32 accumulation); GroupNorm
    # statistics, scale/shift and the residual path stay f32.
    np.testing.assert_allclose(np.asarray(out), np.asarray(ref), rtol=5e-2, atol=5e-2)

    print("KERNEL_OK")
</pallas_src>

<mosaic_0001>
module attributes {stable_mosaic.version = 11 : i64} {
  func.func @_resblock1d_kernel(%arg0: i32, %arg1: memref<1x16x128xf32, #tpu.memory_space<vmem>>, %arg2: memref<6x16x16xbf16, #tpu.memory_space<vmem>>, %arg3: memref<6x16x1xf32, #tpu.memory_space<vmem>>, %arg4: memref<1x16x128xf32, #tpu.memory_space<vmem>>) attributes {dimension_semantics = [#tpu.dimension_semantics<parallel>], iteration_bounds = array<i64: 2>, scalar_prefetch = 0 : i64, scratch_operands = 0 : i64, tpu.core_type = #tpu.core_type<tc>, window_params = [{transform_indices = @transform_0, window_bounds = array<i64: 1, 16, 128>}, {pipeline_mode = #tpu.pipeline_mode<synchronous>, transform_indices = @transform_1, window_bounds = array<i64: 6, 16, 16>}, {pipeline_mode = #tpu.pipeline_mode<synchronous>, transform_indices = @transform_2, window_bounds = array<i64: 6, 16, 1>}, {transform_indices = @transform_3, window_bounds = array<i64: 1, 16, 128>}]} {
    %c0 = arith.constant 0 : index
    %c0_0 = arith.constant 0 : index
    %c0_1 = arith.constant 0 : index
    %0 = vector.load %arg2[%c0, %c0_0, %c0_1] : memref<6x16x16xbf16, #tpu.memory_space<vmem>>, vector<6x16x16xbf16>
    %c0_2 = arith.constant 0 : index
    %c0_3 = arith.constant 0 : index
    %c0_4 = arith.constant 0 : index
    %1 = vector.load %arg3[%c0_2, %c0_3, %c0_4] : memref<6x16x1xf32, #tpu.memory_space<vmem>>, vector<6x16x1xf32>
    %2 = vector.extract_strided_slice %0 {offsets = [0, 0, 0], sizes = [1, 16, 16], strides = [1, 1, 1]} : vector<6x16x16xbf16> to vector<1x16x16xbf16>
    %3 = vector.shape_cast %2 : vector<1x16x16xbf16> to vector<16x16xbf16>
    %4 = vector.extract_strided_slice %0 {offsets = [1, 0, 0], sizes = [1, 16, 16], strides = [1, 1, 1]} : vector<6x16x16xbf16> to vector<1x16x16xbf16>
    %5 = vector.shape_cast %4 : vector<1x16x16xbf16> to vector<16x16xbf16>
    %6 = vector.extract_strided_slice %0 {offsets = [2, 0, 0], sizes = [1, 16, 16], strides = [1, 1, 1]} : vector<6x16x16xbf16> to vector<1x16x16xbf16>
    %7 = vector.shape_cast %6 : vector<1x16x16xbf16> to vector<16x16xbf16>
    %8 = vector.extract_strided_slice %0 {offsets = [3, 0, 0], sizes = [1, 16, 16], strides = [1, 1, 1]} : vector<6x16x16xbf16> to vector<1x16x16xbf16>
    %9 = vector.shape_cast %8 : vector<1x16x16xbf16> to vector<16x16xbf16>
    %10 = vector.extract_strided_slice %0 {offsets = [4, 0, 0], sizes = [1, 16, 16], strides = [1, 1, 1]} : vector<6x16x16xbf16> to vector<1x16x16xbf16>
    %11 = vector.shape_cast %10 : vector<1x16x16xbf16> to vector<16x16xbf16>
    %12 = vector.extract_strided_slice %0 {offsets = [5, 0, 0], sizes = [1, 16, 16], strides = [1, 1, 1]} : vector<6x16x16xbf16> to vector<1x16x16xbf16>
    %13 = vector.shape_cast %12 : vector<1x16x16xbf16> to vector<16x16xbf16>
    %14 = vector.extract_strided_slice %1 {offsets = [0, 0, 0], sizes = [1, 16, 1], strides = [1, 1, 1]} : vector<6x16x1xf32> to vector<1x16x1xf32>
    %15 = vector.shape_cast %14 : vector<1x16x1xf32> to vector<16x1xf32>
    %16 = vector.extract_strided_slice %1 {offsets = [1, 0, 0], sizes = [1, 16, 1], strides = [1, 1, 1]} : vector<6x16x1xf32> to vector<1x16x1xf32>
    %17 = vector.shape_cast %16 : vector<1x16x1xf32> to vector<16x1xf32>
    %18 = vector.extract_strided_slice %1 {offsets = [2, 0, 0], sizes = [1, 16, 1], strides = [1, 1, 1]} : vector<6x16x1xf32> to vector<1x16x1xf32>
    %19 = vector.shape_cast %18 : vector<1x16x1xf32> to vector<16x1xf32>
    %20 = vector.extract_strided_slice %1 {offsets = [3, 0, 0], sizes = [1, 16, 1], strides = [1, 1, 1]} : vector<6x16x1xf32> to vector<1x16x1xf32>
    %21 = vector.shape_cast %20 : vector<1x16x1xf32> to vector<16x1xf32>
    %22 = vector.extract_strided_slice %1 {offsets = [4, 0, 0], sizes = [1, 16, 1], strides = [1, 1, 1]} : vector<6x16x1xf32> to vector<1x16x1xf32>
    %23 = vector.shape_cast %22 : vector<1x16x1xf32> to vector<16x1xf32>
    %24 = vector.extract_strided_slice %1 {offsets = [5, 0, 0], sizes = [1, 16, 1], strides = [1, 1, 1]} : vector<6x16x1xf32> to vector<1x16x1xf32>
    %25 = vector.shape_cast %24 : vector<1x16x1xf32> to vector<16x1xf32>
    %26 = tpu.iota {dimensions = array<i32: 1>} : vector<1x128xi32>
    %c16_i32 = arith.constant 16 : i32
    %27 = vector.broadcast %c16_i32 : i32 to vector<1x128xi32>
    %28 = arith.cmpi slt, %26, %27 : vector<1x128xi32>
    %c0_5 = arith.constant 0 : index
    %c0_6 = arith.constant 0 : index
    %c0_7 = arith.constant 0 : index
    %29 = vector.load %arg1[%c0_5, %c0_6, %c0_7] : memref<1x16x128xf32, #tpu.memory_space<vmem>>, vector<1x16x128xf32>
    %30 = vector.shape_cast %29 : vector<1x16x128xf32> to vector<16x128xf32>
    %31 = arith.truncf %30 : vector<16x128xf32> to vector<16x128xbf16>
    %cst = arith.constant dense<0.000000e+00> : vector<16x128xf32>
    %32 = tpu.matmul %5, %31, %cst {dimension_numbers = #tpu.dot_dimension_numbers<[1], [0], [0], [1], [0, 0, 1, 1], [], []>} : vector<16x16xbf16>, vector<16x128xbf16>, vector<16x128xf32> -> vector<16x128xf32>
    %cst_8 = arith.constant dense<0.000000e+00> : vector<16x128xf32>
    %33 = tpu.matmul %3, %31, %cst_8 {dimension_numbers = #tpu.dot_dimension_numbers<[1], [0], [0], [1], [0, 0, 1, 1], [], []>} : vector<16x16xbf16>, vector<16x128xbf16>, vector<16x128xf32> -> vector<16x128xf32>
    %c1_i32 = arith.constant 1 : i32
    %34 = tpu.dynamic_rotate %33 by %c1_i32 dim 1 : vector<16x128xf32>, i32 -> vector<16x128xf32>
    %cst_9 = arith.constant dense<0.000000e+00> : vector<16x128xf32>
    %35 = tpu.matmul %7, %31, %cst_9 {dimension_numbers = #tpu.dot_dimension_numbers<[1], [0], [0], [1], [0, 0, 1, 1], [], []>} : vector<16x16xbf16>, vector<16x128xbf16>, vector<16x128xf32> -> vector<16x128xf32>
    %c127_i32 = arith.constant 127 : i32
    %36 = tpu.dynamic_rotate %35 by %c127_i32 dim 1 : vector<16x128xf32>, i32 -> vector<16x128xf32>
    %37 = arith.addf %32, %34 : vector<16x128xf32>
    %38 = arith.addf %37, %36 : vector<16x128xf32>
    %39 = vector.broadcast %15 : vector<16x1xf32> to vector<16x128xf32>
    %40 = arith.addf %38, %39 : vector<16x128xf32>
    %cst_10 = arith.constant 0.000000e+00 : f32
    %41 = vector.shape_cast %28 : vector<1x128xi1> to vector<1x128xi1>
    %42 = vector.broadcast %41 : vector<1x128xi1> to vector<16x128xi1>
    %43 = vector.broadcast %cst_10 : f32 to vector<16x128xf32>
    %44 = arith.select %42, %40, %43 : vector<16x128xi1>, vector<16x128xf32>
    %45 = vector.shape_cast %44 : vector<16x128xf32> to vector<1x16x128xf32>
    %cst_11 = arith.constant dense<0.000000e+00> : vector<1xf32>
    %46 = vector.multi_reduction <add>, %45, %cst_11 [1, 2] : vector<1x16x128xf32> to vector<1xf32>
    %47 = vector.shape_cast %46 : vector<1xf32> to vector<1x1x1xf32>
    %48 = vector.extract %47[0, 0, 0] : f32 from vector<1x1x1xf32>
    %49 = vector.broadcast %48 : f32 to vector<1x1xf32>
    %50 = arith.mulf %44, %44 : vector<16x128xf32>
    %51 = vector.shape_cast %50 : vector<16x128xf32> to vector<1x16x128xf32>
    %cst_12 = arith.constant dense<0.000000e+00> : vector<1xf32>
    %52 = vector.multi_reduction <add>, %51, %cst_12 [1, 2] : vector<1x16x128xf32> to vector<1xf32>
    %53 = vector.shape_cast %52 : vector<1xf32> to vector<1x1x1xf32>
    %54 = vector.extract %53[0, 0, 0] : f32 from vector<1x1x1xf32>
    %55 = vector.broadcast %54 : f32 to vector<1x1xf32>
    %cst_13 = arith.constant 1.562500e-02 : f32
    %56 = vector.broadcast %cst_13 : f32 to vector<1x1xf32>
    %57 = arith.mulf %49, %56 : vector<1x1xf32>
    %cst_14 = arith.constant 1.562500e-02 : f32
    %58 = vector.broadcast %cst_14 : f32 to vector<1x1xf32>
    %59 = arith.mulf %55, %58 : vector<1x1xf32>
    %60 = arith.mulf %57, %57 : vector<1x1xf32>
    %61 = arith.subf %59, %60 : vector<1x1xf32>
    %cst_15 = arith.constant 0.000000e+00 : f32
    %62 = vector.broadcast %cst_15 : f32 to vector<1x1xf32>
    %63 = arith.maximumf %61, %62 : vector<1x1xf32>
    %cst_16 = arith.constant 9.99999974E-6 : f32
    %64 = vector.broadcast %cst_16 : f32 to vector<1x1xf32>
    %65 = arith.addf %63, %64 : vector<1x1xf32>
    %66 = math.rsqrt %65 : vector<1x1xf32>
    %67 = vector.broadcast %66 : vector<1x1xf32> to vector<16x1xf32>
    %68 = arith.mulf %17, %67 : vector<16x1xf32>
    %69 = vector.broadcast %57 : vector<1x1xf32> to vector<16x1xf32>
    %70 = arith.mulf %69, %68 : vector<16x1xf32>
    %71 = arith.subf %19, %70 : vector<16x1xf32>
    %72 = vector.broadcast %68 : vector<16x1xf32> to vector<16x128xf32>
    %73 = arith.mulf %44, %72 : vector<16x128xf32>
    %74 = vector.broadcast %71 : vector<16x1xf32> to vector<16x128xf32>
    %75 = arith.addf %73, %74 : vector<16x128xf32>
    %cst_17 = arith.constant 0.000000e+00 : f32
    %76 = vector.broadcast %cst_17 : f32 to vector<16x128xf32>
    %77 = arith.maximumf %75, %76 : vector<16x128xf32>
    %cst_18 = arith.constant 0.000000e+00 : f32
    %78 = vector.shape_cast %28 : vector<1x128xi1> to vector<1x128xi1>
    %79 = vector.broadcast %78 : vector<1x128xi1> to vector<16x128xi1>
    %80 = vector.broadcast %cst_18 : f32 to vector<16x128xf32>
    %81 = arith.select %79, %77, %80 : vector<16x128xi1>, vector<16x128xf32>
    %82 = arith.truncf %81 : vector<16x128xf32> to vector<16x128xbf16>
    %cst_19 = arith.constant dense<0.000000e+00> : vector<16x128xf32>
    %83 = tpu.matmul %11, %82, %cst_19 {dimension_numbers = #tpu.dot_dimension_numbers<[1], [0], [0], [1], [0, 0, 1, 1], [], []>} : vector<16x16xbf16>, vector<16x128xbf16>, vector<16x128xf32> -> vector<16x128xf32>
    %cst_20 = arith.constant dense<0.000000e+00> : vector<16x128xf32>
    %84 = tpu.matmul %9, %82, %cst_20 {dimension_numbers = #tpu.dot_dimension_numbers<[1], [0], [0], [1], [0, 0, 1, 1], [], []>} : vector<16x16xbf16>, vector<16x128xbf16>, vector<16x128xf32> -> vector<16x128xf32>
    %c1_i32_21 = arith.constant 1 : i32
    %85 = tpu.dynamic_rotate %84 by %c1_i32_21 dim 1 : vector<16x128xf32>, i32 -> vector<16x128xf32>
    %cst_22 = arith.constant dense<0.000000e+00> : vector<16x128xf32>
    %86 = tpu.matmul %13, %82, %cst_22 {dimension_numbers = #tpu.dot_dimension_numbers<[1], [0], [0], [1], [0, 0, 1, 1], [], []>} : vector<16x16xbf16>, vector<16x128xbf16>, vector<16x128xf32> -> vector<16x128xf32>
    %c127_i32_23 = arith.constant 127 : i32
    %87 = tpu.dynamic_rotate %86 by %c127_i32_23 dim 1 : vector<16x128xf32>, i32 -> vector<16x128xf32>
    %88 = arith.addf %83, %85 : vector<16x128xf32>
    %89 = arith.addf %88, %87 : vector<16x128xf32>
    %90 = vector.broadcast %21 : vector<16x1xf32> to vector<16x128xf32>
    %91 = arith.addf %89, %90 : vector<16x128xf32>
    %cst_24 = arith.constant 0.000000e+00 : f32
    %92 = vector.shape_cast %28 : vector<1x128xi1> to vector<1x128xi1>
    %93 = vector.broadcast %92 : vector<1x128xi1> to vector<16x128xi1>
    %94 = vector.broadcast %cst_24 : f32 to vector<16x128xf32>
    %95 = arith.select %93, %91, %94 : vector<16x128xi1>, vector<16x128xf32>
    %96 = vector.shape_cast %95 : vector<16x128xf32> to vector<1x16x128xf32>
    %cst_25 = arith.constant dense<0.000000e+00> : vector<1xf32>
    %97 = vector.multi_reduction <add>, %96, %cst_25 [1, 2] : vector<1x16x128xf32> to vector<1xf32>
    %98 = vector.shape_cast %97 : vector<1xf32> to vector<1x1x1xf32>
    %99 = vector.extract %98[0, 0, 0] : f32 from vector<1x1x1xf32>
    %100 = vector.broadcast %99 : f32 to vector<1x1xf32>
    %101 = arith.mulf %95, %95 : vector<16x128xf32>
    %102 = vector.shape_cast %101 : vector<16x128xf32> to vector<1x16x128xf32>
    %cst_26 = arith.constant dense<0.000000e+00> : vector<1xf32>
    %103 = vector.multi_reduction <add>, %102, %cst_26 [1, 2] : vector<1x16x128xf32> to vector<1xf32>
    %104 = vector.shape_cast %103 : vector<1xf32> to vector<1x1x1xf32>
    %105 = vector.extract %104[0, 0, 0] : f32 from vector<1x1x1xf32>
    %106 = vector.broadcast %105 : f32 to vector<1x1xf32>
    %cst_27 = arith.constant 1.562500e-02 : f32
    %107 = vector.broadcast %cst_27 : f32 to vector<1x1xf32>
    %108 = arith.mulf %100, %107 : vector<1x1xf32>
    %cst_28 = arith.constant 1.562500e-02 : f32
    %109 = vector.broadcast %cst_28 : f32 to vector<1x1xf32>
    %110 = arith.mulf %106, %109 : vector<1x1xf32>
    %111 = arith.mulf %108, %108 : vector<1x1xf32>
    %112 = arith.subf %110, %111 : vector<1x1xf32>
    %cst_29 = arith.constant 0.000000e+00 : f32
    %113 = vector.broadcast %cst_29 : f32 to vector<1x1xf32>
    %114 = arith.maximumf %112, %113 : vector<1x1xf32>
    %cst_30 = arith.constant 9.99999974E-6 : f32
    %115 = vector.broadcast %cst_30 : f32 to vector<1x1xf32>
    %116 = arith.addf %114, %115 : vector<1x1xf32>
    %117 = math.rsqrt %116 : vector<1x1xf32>
    %118 = vector.broadcast %117 : vector<1x1xf32> to vector<16x1xf32>
    %119 = arith.mulf %23, %118 : vector<16x1xf32>
    %120 = vector.broadcast %108 : vector<1x1xf32> to vector<16x1xf32>
    %121 = arith.mulf %120, %119 : vector<16x1xf32>
    %122 = arith.subf %25, %121 : vector<16x1xf32>
    %123 = vector.broadcast %119 : vector<16x1xf32> to vector<16x128xf32>
    %124 = arith.mulf %95, %123 : vector<16x128xf32>
    %125 = vector.broadcast %122 : vector<16x1xf32> to vector<16x128xf32>
    %126 = arith.addf %124, %125 : vector<16x128xf32>
    %127 = arith.addf %126, %30 : vector<16x128xf32>
    %cst_31 = arith.constant 0.000000e+00 : f32
    %128 = vector.broadcast %cst_31 : f32 to vector<16x128xf32>
    %129 = arith.maximumf %127, %128 : vector<16x128xf32>
    %c0_32 = arith.constant 0 : index
    %c0_33 = arith.constant 0 : index
    %c0_34 = arith.constant 0 : index
    %130 = vector.load %arg4[%c0_32, %c0_33, %c0_34] : memref<1x16x128xf32, #tpu.memory_space<vmem>>, vector<1x16x128xf32>
    %131 = vector.shape_cast %130 : vector<1x16x128xf32> to vector<16x128xf32>
    %132 = vector.shape_cast %129 : vector<16x128xf32> to vector<1x16x128xf32>
    tpu.vector_store %arg4[%c0_32, %c0_33, %c0_34], %132 {strides = array<i32>} : memref<1x16x128xf32, #tpu.memory_space<vmem>>, vector<1x16x128xf32>,
    return
  }
  func.func @transform_0(%arg0: i32) -> (i32, i32, i32) {
    %c0_i32 = arith.constant 0 : i32
    %c0_i32_0 = arith.constant 0 : i32
    %c0_i32_1 = arith.constant 0 : i32
    return %arg0, %c0_i32, %c0_i32_0 : i32, i32, i32
  }
  func.func @transform_1(%arg0: i32) -> (i32, i32, i32) {
    %c0_i32 = arith.constant 0 : i32
    %c0_i32_0 = arith.constant 0 : i32
    %c0_i32_1 = arith.constant 0 : i32
    %c0_i32_2 = arith.constant 0 : i32
    return %c0_i32, %c0_i32_0, %c0_i32_1 : i32, i32, i32
  }
  func.func @transform_2(%arg0: i32) -> (i32, i32, i32) {
    %c0_i32 = arith.constant 0 : i32
    %c0_i32_0 = arith.constant 0 : i32
    %c0_i32_1 = arith.constant 0 : i32
    %c0_i32_2 = arith.constant 0 : i32
    return %c0_i32, %c0_i32_0, %c0_i32_1 : i32, i32, i32
  }
  func.func @transform_3(%arg0: i32) -> (i32, i32, i32) {
    %c0_i32 = arith.constant 0 : i32
    %c0_i32_0 = arith.constant 0 : i32
    %c0_i32_1 = arith.constant 0 : i32
    return %arg0, %c0_i32, %c0_i32_0 : i32, i32, i32
  }
}

</mosaic_0001>

<llo_original>
// kernel: tpu_custom_call.1
$region0: #{tpu_custom_call.1}
  #allocation0 [shape = 'u32[]', space=smem, size = 0x4, offset = 0x4, fixed_abs, tag = 'smem constant byte address 0x4 - core index']
  #allocation1 [shape = 'u32[144,128]{1,0:T(1,128)}', space=vmem, size = 0x12000, scoped, tag = 'internal scratch']
  %s0 = inlined_call_operand.vmem [shape: f32[2,16,128], index: 0, kind: input, shape index: {}]
  %s1 = inlined_call_operand.vmem [shape: bf16[6,16,16], index: 1, kind: input, shape index: {}]
  %s2 = inlined_call_operand.vmem [shape: f32[6,16,1], index: 2, kind: input, shape index: {}]
  %s3 = inlined_call_operand.hbm [shape: f32[2,16,128], index: 3, kind: output, shape index: {}]
  %s4 = sld [smem:[#allocation0]]
  $region45: #{tpu_custom_call.1} parent=0
    _
  %s6 = ssub.s32 1, %s4
  %s7 = scalar_select 0, %s6, %s4
  $region1: #{tpu_custom_call.1} parent=0
    #allocation2 [shape = 'u8[16384]{0}', space=vmem, size = 0x4000, scoped, tag = 'output window, operand 0']
    #allocation3 [shape = 's32[2]{0}', space=sflag, size = 0x8, scoped, tag = 'scoped memory for tpu_custom_call.1']
    %8 = vsyncpa [#allocation3], 0
    %s9 = scalar_lea.sflag [#allocation3], 1
    %10 = vsyncpa %s9, 0
    loop: start=0, step=1, limit=4
    $region2: #{tpu_custom_call.1} parent=1 // loop_pre_header
      _
    $region3: #{tpu_custom_call.1} parent=1 // loop_header
      %s12 = sphi 0, %s16
      %p13 = scmp.ge.s32.totalorder %s12, 4
      %s22 = sphi 0, %s24
      %s25 = sphi 0, %s22
      %s26 = sphi 0, %s25
      %s42 = sphi 0, %s26
      %s46 = sphi 0, %s46
      %s48 = sphi 0, %s46
      %s49 = sphi 0, %s48
      %s63 = sphi 0, %s49
      %s67 = sphi 0, %s67
      %s69 = sphi 0, %s67
      %s70 = sphi 0, %s69
      %s84 = sphi 0, %s70
      %s90 = sphi 0, %s92
      %s93 = sphi 0, %s90
      %s94 = sphi 0, %s93
      %s110 = sphi 0, %s94
    $region4: #{tpu_custom_call.1} parent=1 // loop_header_branch
      %15 = sbr.rel (%p13) target = $region8
    $region5: #{tpu_custom_call.1} parent=1 // loop_body
      %s17 = ssub.s32 %s12, 1
      %s18 = ssub.s32 %s12, 2
      %s19 = sadd.s32 %s12, 1
      %s20 = ssub.s32 %s12, %s19
      %p21 = scmp.eq.s32.totalorder %s20, 0
      %s23 = sadd.s32 %s22, 1
      %s24 = scalar_select %p21, %s22, %s23
      %p27 = pneg %p21
      %p28 = scmp.eq.s32.totalorder %s12, 1
      %p29 = por %p27, %p28
      %p30 = scmp.ne.s32.totalorder %s22, %s25
      %p31 = scmp.eq.s32.totalorder %s12, 0
      %p32 = por %p30, %p31
      %p33 = scmp.ne.s32.totalorder %s22, %s25
      %p34 = scmp.eq.s32.totalorder %s17, 1
      %p35 = por %p33, %p34
      %p36 = scmp.ne.s32.totalorder %s25, %s26
      %p37 = scmp.eq.s32.totalorder %s17, 0
      %p38 = por %p36, %p37
      %p39 = scmp.ne.s32.totalorder %s25, %s26
      %p40 = scmp.eq.s32.totalorder %s18, 1
      %p41 = por %p39, %p40
      %p43 = scmp.ne.s32.totalorder %s26, %s42
      %p44 = scmp.eq.s32.totalorder %s18, 0
      %p45 = por %p43, %p44
      %s47 = sadd.s32 %s46, 1
      %p50 = scmp.eq.s32.totalorder %s12, 1
      %p51 = scmp.ne.s32.totalorder %s46, %s48
      %p52 = scmp.eq.s32.totalorder %s12, 0
      %p53 = por %p51, %p52
      %p54 = scmp.ne.s32.totalorder %s46, %s48
      %p55 = scmp.eq.s32.totalorder %s17, 1
      %p56 = por %p54, %p55
      %p57 = scmp.ne.s32.totalorder %s48, %s49
      %p58 = scmp.eq.s32.totalorder %s17, 0
      %p59 = por %p57, %p58
      %p60 = scmp.ne.s32.totalorder %s48, %s49
      %p61 = scmp.eq.s32.totalorder %s18, 1
      %p62 = por %p60, %p61
      %p64 = scmp.ne.s32.totalorder %s49, %s63
      %p65 = scmp.eq.s32.totalorder %s18, 0
      %p66 = por %p64, %p65
      %s68 = sadd.s32 %s67, 1
      %p71 = scmp.eq.s32.totalorder %s12, 1
      %p72 = scmp.ne.s32.totalorder %s67, %s69
      %p73 = scmp.eq.s32.totalorder %s12, 0
      %p74 = por %p72, %p73
      %p75 = scmp.ne.s32.totalorder %s67, %s69
      %p76 = scmp.eq.s32.totalorder %s17, 1
      %p77 = por %p75, %p76
      %p78 = scmp.ne.s32.totalorder %s69, %s70
      %p79 = scmp.eq.s32.totalorder %s17, 0
      %p80 = por %p78, %p79
      %p81 = scmp.ne.s32.totalorder %s69, %s70
      %p82 = scmp.eq.s32.totalorder %s18, 1
      %p83 = por %p81, %p82
      %p85 = scmp.ne.s32.totalorder %s70, %s84
      %p86 = scmp.eq.s32.totalorder %s18, 0
      %p87 = por %p85, %p86
      %s88 = ssub.s32 %s12, %s19
      %p89 = scmp.eq.s32.totalorder %s88, 0
      %s91 = sadd.s32 %s90, 1
      %s92 = scalar_select %p89, %s90, %s91
      %p95 = pneg %p89
      %p96 = scmp.eq.s32.totalorder %s12, 1
      %p97 = por %p95, %p96
      %p98 = scmp.ne.s32.totalorder %s90, %s93
      %p99 = scmp.eq.s32.totalorder %s12, 0
      %p100 = por %p98, %p99
      %p101 = scmp.ne.s32.totalorder %s90, %s93
      %p102 = scmp.eq.s32.totalorder %s17, 1
      %p103 = por %p101, %p102
      %p104 = scmp.ne.s32.totalorder %s93, %s94
      %p105 = scmp.eq.s32.totalorder %s17, 0
      %p106 = por %p104, %p105
      %p107 = scmp.ne.s32.totalorder %s93, %s94
      %p108 = scmp.eq.s32.totalorder %s18, 1
      %p109 = por %p107, %p108
      %p111 = scmp.ne.s32.totalorder %s94, %s110
      %p112 = scmp.eq.s32.totalorder %s18, 0
      %p113 = por %p111, %p112
      %p114 = scmp.le.s32.totalorder 1, %s12
      %p115 = scmp.lt.s32.totalorder %s12, 3
      %p116 = pnand %p114, %p115
      %p117 = pneg %p116
      // Predicated region
      $region9: #{tpu_custom_call.1} parent=5 // pred_check
        _
      $region10: #{tpu_custom_call.1} parent=5 // pred_check_branch
        %119 = sbr.rel (%p116) target = $region12
      $region11: #{tpu_custom_call.1} parent=5 // pred_region
        %s120 = ssub.s32 %s12, 1
        // Predicated region
        $region13: #{tpu_custom_call.1} parent=11 // pred_check
          %p121 = pneg %p59
        $region14: #{tpu_custom_call.1} parent=11 // pred_check_branch
          %123 = sbr.rel (%p121) target = $region16
        $region15: #{tpu_custom_call.1} parent=11 // pred_region
          _
        $region16: #{tpu_custom_call.1} parent=11 // pred_fallthru
          _
        // Predicated region
        $region17: #{tpu_custom_call.1} parent=11 // pred_check
          %p124 = pneg %p80
        $region18: #{tpu_custom_call.1} parent=11 // pred_check_branch
          %126 = sbr.rel (%p124) target = $region20
        $region19: #{tpu_custom_call.1} parent=11 // pred_region
          _
        $region20: #{tpu_custom_call.1} parent=11 // pred_fallthru
          _
      $region12: #{tpu_custom_call.1} parent=5 // pred_fallthru
        _
      %p127 = scmp.lt.s32.totalorder %s12, 2
      // Predicated region
      $region21: #{tpu_custom_call.1} parent=5 // pred_check
        %p128 = pneg %p127
      $region22: #{tpu_custom_call.1} parent=5 // pred_check_branch
        %130 = sbr.rel (%p128) target = $region24
      $region23: #{tpu_custom_call.1} parent=5 // pred_region
        // Predicated region
        $region25: #{tpu_custom_call.1} parent=23 // pred_check
          %p131 = pneg %p32
        $region26: #{tpu_custom_call.1} parent=23 // pred_check_branch
          %133 = sbr.rel (%p131) target = $region28
        $region27: #{tpu_custom_call.1} parent=23 // pred_region
          %p134 = scmp.lt.s32.totalorder %s12, 1
          %s135 = scalar_select %p134, %s12, 1
          %s136 = smul.addr %s135, 2
          %s137 = smul.addr %s136, 8
          %s138 = scalar_lea.vmem %s0, %s137
        $region28: #{tpu_custom_call.1} parent=23 // pred_fallthru
          _
      $region24: #{tpu_custom_call.1} parent=5 // pred_fallthru
        _
      %p139 = scmp.le.s32.totalorder 1, %s12
      %p140 = scmp.lt.s32.totalorder %s12, 3
      %p141 = pnand %p139, %p140
      %p142 = pneg %p141
      // Predicated region
      $region29: #{tpu_custom_call.1} parent=5 // pred_check
        _
      $region30: #{tpu_custom_call.1} parent=5 // pred_check_branch
        %144 = sbr.rel (%p141) target = $region32
      $region31: #{tpu_custom_call.1} parent=5 // pred_region
        %s145 = ssub.s32 %s12, 1
        %p146 = scmp.lt.s32.totalorder %s17, 1
        %s147 = scalar_select %p146, %s17, 1
        %s148 = smul.addr %s147, 2
        %s149 = smul.addr %s148, 8
        %s150 = scalar_lea.vmem %s0, %s149
        %p151 = pneg %p38
        %p152 = pneg %p35
        %p153 = pneg %p59
        %p154 = pneg %p56
        %p155 = pneg %p80
        %p156 = pneg %p77
        %p157 = pneg %p106
        %p158 = pneg %p103
        %s159 = sand.u32 %s93, 1
        %s160 = scalar_lea.sflag [#allocation3], %s159
        %s161 = sand.u32 %s93, 1
        %s162 = smul.addr %s161, 16
        %s163 = scalar_lea.vmem [#allocation2], %s162
        %p164 = scmp.lt.s32.totalorder %s17, 1
        %s165 = scalar_select %p164, %s17, 1
        %s166 = smul.addr %s165, 2
        %s167 = smul.addr %s166, 8
        %s168 = scalar_lea.vmem %s0, %s167
        %v170 = vld [vmem:[%s1] sm:$0xf]
        %v171 = vld [vmem:[%s1 + $0x4] sm:$0xf]
        %v172 = vld [vmem:[%s1 + $0x8] sm:$0xf]
        %v173 = vld [vmem:[%s1 + $0xc] sm:$0xf]
        %v174 = vld [vmem:[%s1 + $0x10] sm:$0xf]
        %v175 = vld [vmem:[%s1 + $0x14] sm:$0xf]
        %v176 = vld [vmem:[%s1 + $0x18] sm:$0xf]
        %v177 = vld [vmem:[%s1 + $0x1c] sm:$0xf]
        %v178 = vld [vmem:[%s1 + $0x20] sm:$0xf]
        %v179 = vld [vmem:[%s1 + $0x24] sm:$0xf]
        %v180 = vld [vmem:[%s1 + $0x28] sm:$0xf]
        %v181 = vld [vmem:[%s1 + $0x2c] sm:$0xf]
        %v182 = vld [vmem:[%s2] sm:$0xff]
        %v183 = vld [vmem:[%s2 + $0x8] sm:$0xff]
        %v184 = vld [vmem:[%s2 + $0x10] sm:$0xff]
        %v185 = vld [vmem:[%s2 + $0x18] sm:$0xff]
        %v186 = vld [vmem:[%s2 + $0x20] sm:$0xff]
        %v187 = vld [vmem:[%s2 + $0x28] sm:$0xff]
        %v188 = vld [vmem:[%s2 + $0x30] sm:$0xff]
        %v189 = vld [vmem:[%s2 + $0x38] sm:$0xff]
        %v190 = vld [vmem:[%s2 + $0x40] sm:$0xff]
        %v191 = vld [vmem:[%s2 + $0x48] sm:$0xff]
        %v192 = vld [vmem:[%s2 + $0x50] sm:$0xff]
        %v193 = vld [vmem:[%s2 + $0x58] sm:$0xff]
        %v194 = vlaneseq
        %v195 = vand.u32 %v194, 127
        %vm196 = vcmp.lt.s32.totalorder %v195, 16
        %v197 = vld [vmem:[%s168] sm:$0xff]
        %v198 = vld [vmem:[%s168 + $0x8] sm:$0xff]
        %v199 = vpack.c.bf16 %v198, %v197
        %v202 = vunpack.c.l.b16 %v170
        %v203 = vunpack.c.l.b16 %v171
        %v204 = vpack.c.b16 %v203, %v202
        %vm205 = vcmask 130048
        %v207 = vsel %vm205, %v204, 0
        %209 = vmatprep.subr.bf16.mxu0 0
        %210 = vmatpush1.bf16.msra.mxu0 %v199
        %211 = vmatprep.subr.bf16.mxu0 0
        %212 = vmatpush1.bf16.msra.mxu0 0
        %213 = vmatprep.subr.bf16.mxu0 0
        %214 = vmatpush1.bf16.msra.mxu0 0
        %215 = vmatprep.subr.bf16.mxu0 0
        %216 = vmatpush1.bf16.msra.mxu0 0
        %217 = vmatprep.subr.bf16.mxu0 0
        %218 = vmatpush1.bf16.msra.mxu0 0
        %219 = vmatprep.subr.bf16.mxu0 0
        %220 = vmatpush1.bf16.msra.mxu0 0
        %221 = vmatprep.subr.bf16.mxu0 0
        %222 = vmatpush1.bf16.msra.mxu0 0
        %223 = vmatprep.subr.bf16.mxu0 0
        %224 = vmatpush1.bf16.msra.mxu0 0
        %225 = vmatprep.subr.bf16.mxu0 0
        %226 = vmatpush1.bf16.msra.mxu0 0
        %227 = vmatprep.subr.bf16.mxu0 0
        %228 = vmatpush1.bf16.msra.mxu0 0
        %229 = vmatprep.subr.bf16.mxu0 0
        %230 = vmatpush1.bf16.msra.mxu0 0
        %231 = vmatprep.subr.bf16.mxu0 0
        %232 = vmatpush1.bf16.msra.mxu0 0
        %233 = vmatprep.subr.bf16.mxu0 0
        %234 = vmatpush1.bf16.msra.mxu0 0
        %235 = vmatprep.subr.bf16.mxu0 0
        %236 = vmatpush1.bf16.msra.mxu0 0
        %237 = vmatprep.subr.bf16.mxu0 0
        %238 = vmatpush1.bf16.msra.mxu0 0
        %239 = vmatprep.subr.bf16.mxu0 0
        %240 = vmatpush1.bf16.msra.mxu0 0
        %241 = vmatprep.mubr.bf16.mxu0 0
        %242 = vmatmul.mubr.bf16.gmra.mrb[0].mxu0 %v207
        %v243 = vpop.f32.mrb[0].mxu0
        %v244 = vadd.f32 0.0, %v243
        %v245 = vpop.f32.mrb[0].mxu0
        %v246 = vpop.f32.mrb[0].mxu0
        %v247 = vadd.f32 0.0, %v246
        %v248 = vpop.f32.mrb[0].mxu0
        %249 = vdwg.mxu0
        %250 = vrot.lane.b32.xlu0 %v244, 1
        %v251 = vpop.permute.xlu0 %250
        %252 = vrot.lane.b32.xlu0 %v247, 1
        %v253 = vpop.permute.xlu0 %252
        %v256 = vunpack.c.l.b16 %v174
        %v257 = vunpack.c.l.b16 %v175
        %v258 = vpack.c.b16 %v257, %v256
        %v260 = vsel %vm205, %v258, 0
        %262 = vmatprep.subr.bf16.mxu0 0
        %263 = vmatpush1.bf16.msra.mxu0 %v199
        %264 = vmatprep.subr.bf16.mxu0 0
        %265 = vmatpush1.bf16.msra.mxu0 0
        %266 = vmatprep.subr.bf16.mxu0 0
        %267 = vmatpush1.bf16.msra.mxu0 0
        %268 = vmatprep.subr.bf16.mxu0 0
        %269 = vmatpush1.bf16.msra.mxu0 0
        %270 = vmatprep.subr.bf16.mxu0 0
        %271 = vmatpush1.bf16.msra.mxu0 0
        %272 = vmatprep.subr.bf16.mxu0 0
        %273 = vmatpush1.bf16.msra.mxu0 0
        %274 = vmatprep.subr.bf16.mxu0 0
        %275 = vmatpush1.bf16.msra.mxu0 0
        %276 = vmatprep.subr.bf16.mxu0 0
        %277 = vmatpush1.bf16.msra.mxu0 0
        %278 = vmatprep.subr.bf16.mxu0 0
        %279 = vmatpush1.bf16.msra.mxu0 0
        %280 = vmatprep.subr.bf16.mxu0 0
        %281 = vmatpush1.bf16.msra.mxu0 0
        %282 = vmatprep.subr.bf16.mxu0 0
        %283 = vmatpush1.bf16.msra.mxu0 0
        %284 = vmatprep.subr.bf16.mxu0 0
        %285 = vmatpush1.bf16.msra.mxu0 0
        %286 = vmatprep.subr.bf16.mxu0 0
        %287 = vmatpush1.bf16.msra.mxu0 0
        %288 = vmatprep.subr.bf16.mxu0 0
        %289 = vmatpush1.bf16.msra.mxu0 0
        %290 = vmatprep.subr.bf16.mxu0 0
        %291 = vmatpush1.bf16.msra.mxu0 0
        %292 = vmatprep.subr.bf16.mxu0 0
        %293 = vmatpush1.bf16.msra.mxu0 0
        %294 = vmatprep.mubr.bf16.mxu0 0
        %295 = vmatmul.mubr.bf16.gmra.mrb[0].mxu0 %v260
        %v296 = vpop.f32.mrb[0].mxu0
        %v297 = vadd.f32 0.0, %v296
        %v298 = vpop.f32.mrb[0].mxu0
        %v299 = vpop.f32.mrb[0].mxu0
        %v300 = vadd.f32 0.0, %v299
        %v301 = vpop.f32.mrb[0].mxu0
        %302 = vdwg.mxu0
        %303 = vrot.lane.b32.xlu0 %v297, 127
        %v304 = vpop.permute.xlu0 %303
        %305 = vrot.lane.b32.xlu0 %v300, 127
        %v306 = vpop.permute.xlu0 %305
        %v309 = vunpack.c.l.b16 %v172
        %v310 = vunpack.c.l.b16 %v173
        %v311 = vpack.c.b16 %v310, %v309
        %v313 = vsel %vm205, %v311, 0
        %315 = vmatprep.subr.bf16.mxu0 0
        %316 = vmatpush1.bf16.msra.mxu0 %v199
        %317 = vmatprep.subr.bf16.mxu0 0
        %318 = vmatpush1.bf16.msra.mxu0 0
        %319 = vmatprep.subr.bf16.mxu0 0
        %320 = vmatpush1.bf16.msra.mxu0 0
        %321 = vmatprep.subr.bf16.mxu0 0
        %322 = vmatpush1.bf16.msra.mxu0 0
        %323 = vmatprep.subr.bf16.mxu0 0
        %324 = vmatpush1.bf16.msra.mxu0 0
        %325 = vmatprep.subr.bf16.mxu0 0
        %326 = vmatpush1.bf16.msra.mxu0 0
        %327 = vmatprep.subr.bf16.mxu0 0
        %328 = vmatpush1.bf16.msra.mxu0 0
        %329 = vmatprep.subr.bf16.mxu0 0
        %330 = vmatpush1.bf16.msra.mxu0 0
        %331 = vmatprep.subr.bf16.mxu0 0
        %332 = vmatpush1.bf16.msra.mxu0 0
        %333 = vmatprep.subr.bf16.mxu0 0
        %334 = vmatpush1.bf16.msra.mxu0 0
        %335 = vmatprep.subr.bf16.mxu0 0
        %336 = vmatpush1.bf16.msra.mxu0 0
        %337 = vmatprep.subr.bf16.mxu0 0
        %338 = vmatpush1.bf16.msra.mxu0 0
        %339 = vmatprep.subr.bf16.mxu0 0
        %340 = vmatpush1.bf16.msra.mxu0 0
        %341 = vmatprep.subr.bf16.mxu0 0
        %342 = vmatpush1.bf16.msra.mxu0 0
        %343 = vmatprep.subr.bf16.mxu0 0
        %344 = vmatpush1.bf16.msra.mxu0 0
        %345 = vmatprep.subr.bf16.mxu0 0
        %346 = vmatpush1.bf16.msra.mxu0 0
        %347 = vmatprep.mubr.bf16.mxu0 0
        %348 = vmatmul.mubr.bf16.gmra.mrb[0].mxu0 %v313
        %v349 = vpop.f32.mrb[0].mxu0
        %v350 = vadd.f32 %v251, %v349
        %v351 = vpop.f32.mrb[0].mxu0
        %v352 = vpop.f32.mrb[0].mxu0
        %v353 = vadd.f32 %v253, %v352
        %v354 = vpop.f32.mrb[0].mxu0
        %355 = vdwg.mxu0
        %v356 = vadd.f32 %v350, %v304
        %v357 = vadd.f32 %v353, %v306
        %359 = vset.pattern.permute.xlu0 0
        %360 = vperm.xlu0 %359, %v182
        %v361 = vpop.permute.xlu0 %360
        %364 = vset.pattern.permute.xlu0 0
        %365 = vperm.xlu0 %364, %v183
        %v366 = vpop.permute.xlu0 %365
        %v368 = vadd.f32 %v356, %v361
        %v369 = vadd.f32 %v357, %v366
        %v370 = vsel %vm196, 1, 0
        %vm371 = vcmp.eq.s32.totalorder %v370, 1
        %v372 = vsel %vm371, %v368, 0.0
        %v373 = vsel %vm371, %v369, 0.0
        %v374 = vadd.f32 %v372, %v373
        %375 = vadd.xlane.f32.xlu0 %v374
        %v376 = vpop.xlane.xlu0 %375
        %v377 = vrot.slane %v376, 4
        %v378 = vadd.f32 %v376, %v377
        %v379 = vrot.slane %v378, 2
        %v380 = vadd.f32 %v378, %v379
        %v381 = vrot.slane %v380, 1
        %v382 = vadd.f32 %v380, %v381
        %s383 = vtos %v382
        %v384 = vstv %s383
        %v385 = vmul.f32 %v372, %v372
        %v386 = vmul.f32 %v373, %v373
        %v387 = vadd.f32 %v385, %v386
        %388 = vadd.xlane.f32.xlu0 %v387
        %v389 = vpop.xlane.xlu0 %388
        %v390 = vrot.slane %v389, 4
        %v391 = vadd.f32 %v389, %v390
        %v392 = vrot.slane %v391, 2
        %v393 = vadd.f32 %v391, %v392
        %v394 = vrot.slane %v393, 1
        %v395 = vadd.f32 %v393, %v394
        %s396 = vtos %v395
        %v397 = vstv %s396
        %v398 = vmul.f32 %v384, 0.015625
        %v399 = vmul.f32 %v397, 0.015625
        %v400 = vmul.f32 %v398, %v398
        %v401 = vsub.f32 %v399, %v400
        %v402 = vmax.f32 %v401, 0.0
        %v403 = vadd.f32 %v402, 1e-05
        %v404 = vrsqrt.pop %v403
        %v405 = vmul.f32 %v184, %v404
        %v406 = vmul.f32 %v185, %v404
        %v407 = vmul.f32 %v398, %v405
        %v408 = vmul.f32 %v398, %v406
        %v409 = vsub.f32 %v186, %v407
        %v410 = vsub.f32 %v187, %v408
        %412 = vset.pattern.permute.xlu0 0
        %413 = vperm.xlu0 %412, %v405
        %v414 = vpop.permute.xlu0 %413
        %417 = vset.pattern.permute.xlu0 0
        %418 = vperm.xlu0 %417, %v406
        %v419 = vpop.permute.xlu0 %418
        %v421 = vmul.f32 %v372, %v414
        %v422 = vmul.f32 %v373, %v419
        %424 = vset.pattern.permute.xlu0 0
        %425 = vperm.xlu0 %424, %v409
        %v426 = vpop.permute.xlu0 %425
        %429 = vset.pattern.permute.xlu0 0
        %430 = vperm.xlu0 %429, %v410
        %v431 = vpop.permute.xlu0 %430
        %v433 = vadd.f32 %v421, %v426
        %v434 = vadd.f32 %v422, %v431
        %v435 = vmax.f32 %v433, 0.0
        %v436 = vmax.f32 %v434, 0.0
        %v437 = vsel %vm371, %v435, 0.0
        %v438 = vsel %vm371, %v436, 0.0
        %v439 = vpack.c.bf16 %v438, %v437
        %v442 = vunpack.c.l.b16 %v176
        %v443 = vunpack.c.l.b16 %v177
        %v444 = vpack.c.b16 %v443, %v442
        %v446 = vsel %vm205, %v444, 0
        %448 = vmatprep.subr.bf16.mxu0 0
        %449 = vmatpush1.bf16.msra.mxu0 %v439
        %450 = vmatprep.subr.bf16.mxu0 0
        %451 = vmatpush1.bf16.msra.mxu0 0
        %452 = vmatprep.subr.bf16.mxu0 0
        %453 = vmatpush1.bf16.msra.mxu0 0
        %454 = vmatprep.subr.bf16.mxu0 0
        %455 = vmatpush1.bf16.msra.mxu0 0
        %456 = vmatprep.subr.bf16.mxu0 0
        %457 = vmatpush1.bf16.msra.mxu0 0
        %458 = vmatprep.subr.bf16.mxu0 0
        %459 = vmatpush1.bf16.msra.mxu0 0
        %460 = vmatprep.subr.bf16.mxu0 0
        %461 = vmatpush1.bf16.msra.mxu0 0
        %462 = vmatprep.subr.bf16.mxu0 0
        %463 = vmatpush1.bf16.msra.mxu0 0
        %464 = vmatprep.subr.bf16.mxu0 0
        %465 = vmatpush1.bf16.msra.mxu0 0
        %466 = vmatprep.subr.bf16.mxu0 0
        %467 = vmatpush1.bf16.msra.mxu0 0
        %468 = vmatprep.subr.bf16.mxu0 0
        %469 = vmatpush1.bf16.msra.mxu0 0
        %470 = vmatprep.subr.bf16.mxu0 0
        %471 = vmatpush1.bf16.msra.mxu0 0
        %472 = vmatprep.subr.bf16.mxu0 0
        %473 = vmatpush1.bf16.msra.mxu0 0
        %474 = vmatprep.subr.bf16.mxu0 0
        %475 = vmatpush1.bf16.msra.mxu0 0
        %476 = vmatprep.subr.bf16.mxu0 0
        %477 = vmatpush1.bf16.msra.mxu0 0
        %478 = vmatprep.subr.bf16.mxu0 0
        %479 = vmatpush1.bf16.msra.mxu0 0
        %480 = vmatprep.mubr.bf16.mxu0 0
        %481 = vmatmul.mubr.bf16.gmra.mrb[0].mxu0 %v446
        %v482 = vpop.f32.mrb[0].mxu0
        %v483 = vadd.f32 0.0, %v482
        %v484 = vpop.f32.mrb[0].mxu0
        %v485 = vpop.f32.mrb[0].mxu0
        %v486 = vadd.f32 0.0, %v485
        %v487 = vpop.f32.mrb[0].mxu0
        %488 = vdwg.mxu0
        %489 = vrot.lane.b32.xlu0 %v483, 1
        %v490 = vpop.permute.xlu0 %489
        %491 = vrot.lane.b32.xlu0 %v486, 1
        %v492 = vpop.permute.xlu0 %491
        %v495 = vunpack.c.l.b16 %v180
        %v496 = vunpack.c.l.b16 %v181
        %v497 = vpack.c.b16 %v496, %v495
        %v499 = vsel %vm205, %v497, 0
        %501 = vmatprep.subr.bf16.mxu0 0
        %502 = vmatpush1.bf16.msra.mxu0 %v439
        %503 = vmatprep.subr.bf16.mxu0 0
        %504 = vmatpush1.bf16.msra.mxu0 0
        %505 = vmatprep.subr.bf16.mxu0 0
        %506 = vmatpush1.bf16.msra.mxu0 0
        %507 = vmatprep.subr.bf16.mxu0 0
        %508 = vmatpush1.bf16.msra.mxu0 0
        %509 = vmatprep.subr.bf16.mxu0 0
        %510 = vmatpush1.bf16.msra.mxu0 0
        %511 = vmatprep.subr.bf16.mxu0 0
        %512 = vmatpush1.bf16.msra.mxu0 0
        %513 = vmatprep.subr.bf16.mxu0 0
        %514 = vmatpush1.bf16.msra.mxu0 0
        %515 = vmatprep.subr.bf16.mxu0 0
        %516 = vmatpush1.bf16.msra.mxu0 0
        %517 = vmatprep.subr.bf16.mxu0 0
        %518 = vmatpush1.bf16.msra.mxu0 0
        %519 = vmatprep.subr.bf16.mxu0 0
        %520 = vmatpush1.bf16.msra.mxu0 0
        %521 = vmatprep.subr.bf16.mxu0 0
        %522 = vmatpush1.bf16.msra.mxu0 0
        %523 = vmatprep.subr.bf16.mxu0 0
        %524 = vmatpush1.bf16.msra.mxu0 0
        %525 = vmatprep.subr.bf16.mxu0 0
        %526 = vmatpush1.bf16.msra.mxu0 0
        %527 = vmatprep.subr.bf16.mxu0 0
        %528 = vmatpush1.bf16.msra.mxu0 0
        %529 = vmatprep.subr.bf16.mxu0 0
        %530 = vmatpush1.bf16.msra.mxu0 0
        %531 = vmatprep.subr.bf16.mxu0 0
        %532 = vmatpush1.bf16.msra.mxu0 0
        %533 = vmatprep.mubr.bf16.mxu0 0
        %534 = vmatmul.mubr.bf16.gmra.mrb[0].mxu0 %v499
        %v535 = vpop.f32.mrb[0].mxu0
        %v536 = vadd.f32 0.0, %v535
        %v537 = vpop.f32.mrb[0].mxu0
        %v538 = vpop.f32.mrb[0].mxu0
        %v539 = vadd.f32 0.0, %v538
        %v540 = vpop.f32.mrb[0].mxu0
        %541 = vdwg.mxu0
        %542 = vrot.lane.b32.xlu0 %v536, 127
        %v543 = vpop.permute.xlu0 %542
        %544 = vrot.lane.b32.xlu0 %v539, 127
        %v545 = vpop.permute.xlu0 %544
        %v548 = vunpack.c.l.b16 %v178
        %v549 = vunpack.c.l.b16 %v179
        %v550 = vpack.c.b16 %v549, %v548
        %v552 = vsel %vm205, %v550, 0
        %554 = vmatprep.subr.bf16.mxu0 0
        %555 = vmatpush1.bf16.msra.mxu0 %v439
        %556 = vmatprep.subr.bf16.mxu0 0
        %557 = vmatpush1.bf16.msra.mxu0 0
        %558 = vmatprep.subr.bf16.mxu0 0
        %559 = vmatpush1.bf16.msra.mxu0 0
        %560 = vmatprep.subr.bf16.mxu0 0
        %561 = vmatpush1.bf16.msra.mxu0 0
        %562 = vmatprep.subr.bf16.mxu0 0
        %563 = vmatpush1.bf16.msra.mxu0 0
        %564 = vmatprep.subr.bf16.mxu0 0
        %565 = vmatpush1.bf16.msra.mxu0 0
        %566 = vmatprep.subr.bf16.mxu0 0
        %567 = vmatpush1.bf16.msra.mxu0 0
        %568 = vmatprep.subr.bf16.mxu0 0
        %569 = vmatpush1.bf16.msra.mxu0 0
        %570 = vmatprep.subr.bf16.mxu0 0
        %571 = vmatpush1.bf16.msra.mxu0 0
        %572 = vmatprep.subr.bf16.mxu0 0
        %573 = vmatpush1.bf16.msra.mxu0 0
        %574 = vmatprep.subr.bf16.mxu0 0
        %575 = vmatpush1.bf16.msra.mxu0 0
        %576 = vmatprep.subr.bf16.mxu0 0
        %577 = vmatpush1.bf16.msra.mxu0 0
        %578 = vmatprep.subr.bf16.mxu0 0
        %579 = vmatpush1.bf16.msra.mxu0 0
        %580 = vmatprep.subr.bf16.mxu0 0
        %581 = vmatpush1.bf16.msra.mxu0 0
        %582 = vmatprep.subr.bf16.mxu0 0
        %583 = vmatpush1.bf16.msra.mxu0 0
        %584 = vmatprep.subr.bf16.mxu0 0
        %585 = vmatpush1.bf16.msra.mxu0 0
        %586 = vmatprep.mubr.bf16.mxu0 0
        %587 = vmatmul.mubr.bf16.gmra.mrb[0].mxu0 %v552
        %v588 = vpop.f32.mrb[0].mxu0
        %v589 = vadd.f32 %v490, %v588
        %v590 = vpop.f32.mrb[0].mxu0
        %v591 = vpop.f32.mrb[0].mxu0
        %v592 = vadd.f32 %v492, %v591
        %v593 = vpop.f32.mrb[0].mxu0
        %594 = vdwg.mxu0
        %v595 = vadd.f32 %v589, %v543
        %v596 = vadd.f32 %v592, %v545
        %598 = vset.pattern.permute.xlu0 0
        %599 = vperm.xlu0 %598, %v188
        %v600 = vpop.permute.xlu0 %599
        %603 = vset.pattern.permute.xlu0 0
        %604 = vperm.xlu0 %603, %v189
        %v605 = vpop.permute.xlu0 %604
        %v607 = vadd.f32 %v595, %v600
        %v608 = vadd.f32 %v596, %v605
        %v609 = vsel %vm371, %v607, 0.0
        %v610 = vsel %vm371, %v608, 0.0
        %v611 = vadd.f32 %v609, %v610
        %612 = vadd.xlane.f32.xlu0 %v611
        %v613 = vpop.xlane.xlu0 %612
        %v614 = vrot.slane %v613, 4
        %v615 = vadd.f32 %v613, %v614
        %v616 = vrot.slane %v615, 2
        %v617 = vadd.f32 %v615, %v616
        %v618 = vrot.slane %v617, 1
        %v619 = vadd.f32 %v617, %v618
        %s620 = vtos %v619
        %v621 = vstv %s620
        %v622 = vmul.f32 %v609, %v609
        %v623 = vmul.f32 %v610, %v610
        %v624 = vadd.f32 %v622, %v623
        %625 = vadd.xlane.f32.xlu0 %v624
        %v626 = vpop.xlane.xlu0 %625
        %v627 = vrot.slane %v626, 4
        %v628 = vadd.f32 %v626, %v627
        %v629 = vrot.slane %v628, 2
        %v630 = vadd.f32 %v628, %v629
        %v631 = vrot.slane %v630, 1
        %v632 = vadd.f32 %v630, %v631
        %s633 = vtos %v632
        %v634 = vstv %s633
        %v635 = vmul.f32 %v621, 0.015625
        %v636 = vmul.f32 %v634, 0.015625
        %v637 = vmul.f32 %v635, %v635
        %v638 = vsub.f32 %v636, %v637
        %v639 = vmax.f32 %v638, 0.0
        %v640 = vadd.f32 %v639, 1e-05
        %v641 = vrsqrt.pop %v640
        %v642 = vmul.f32 %v190, %v641
        %v643 = vmul.f32 %v191, %v641
        %v644 = vmul.f32 %v635, %v642
        %v645 = vmul.f32 %v635, %v643
        %v646 = vsub.f32 %v192, %v644
        %v647 = vsub.f32 %v193, %v645
        %649 = vset.pattern.permute.xlu0 0
        %650 = vperm.xlu0 %649, %v642
        %v651 = vpop.permute.xlu0 %650
        %654 = vset.pattern.permute.xlu0 0
        %655 = vperm.xlu0 %654, %v643
        %v656 = vpop.permute.xlu0 %655
        %v658 = vmul.f32 %v609, %v651
        %v659 = vmul.f32 %v610, %v656
        %661 = vset.pattern.permute.xlu0 0
        %662 = vperm.xlu0 %661, %v646
        %v663 = vpop.permute.xlu0 %662
        %666 = vset.pattern.permute.xlu0 0
        %667 = vperm.xlu0 %666, %v647
        %v668 = vpop.permute.xlu0 %667
        %v670 = vadd.f32 %v658, %v663
        %v671 = vadd.f32 %v659, %v668
        %v672 = vadd.f32 %v670, %v197
        %v673 = vadd.f32 %v671, %v198
        %v674 = vmax.f32 %v672, 0.0
        %v675 = vmax.f32 %v673, 0.0
        %676 = vst [vmem:[%s163] sm:$0xff] %v674
        %677 = vst [vmem:[%s163 + $0x8] sm:$0xff] %v675
        %s678 = sand.u32 %s93, 1
        %s679 = scalar_lea.sflag [#allocation3], %s678
        %s680 = sand.u32 %s93, 1
        %s681 = smul.addr %s680, 16
        %s682 = scalar_lea.vmem [#allocation2], %s681
        // Predicated region
        $region33: #{tpu_custom_call.1} parent=31 // pred_check
          %p683 = pneg %p103
        $region34: #{tpu_custom_call.1} parent=31 // pred_check_branch
          %685 = sbr.rel (%p683) target = $region36
        $region35: #{tpu_custom_call.1} parent=31 // pred_region
          %s687 = ssub.s32 256, 256
          %688 = vsyncadd %s679, %s687
          %s689 = smul.addr %s17, 2
          %s690 = smul.addr %s689, 128
          %s691 = scalar_lea.hbm %s3, %s690
          %s692 = sshll.u32 %s682, 4
          %s693 = int_to_ptr.vmem [resolvable:$true] %s692
          %698 = dma.vmem_to_hbm [thread:$0]  %s693, 256, %s691, %s679, 128, 128, 8
        $region36: #{tpu_custom_call.1} parent=31 // pred_fallthru
          _
      $region32: #{tpu_custom_call.1} parent=5 // pred_fallthru
        _
      %p699 = scmp.le.s32.totalorder 2, %s12
      // Predicated region
      $region37: #{tpu_custom_call.1} parent=5 // pred_check
        %p700 = pneg %p699
      $region38: #{tpu_custom_call.1} parent=5 // pred_check_branch
        %702 = sbr.rel (%p700) target = $region40
      $region39: #{tpu_custom_call.1} parent=5 // pred_region
        %s703 = ssub.s32 %s12, 2
        // Predicated region
        $region41: #{tpu_custom_call.1} parent=39 // pred_check
          %p704 = pneg %p109
        $region42: #{tpu_custom_call.1} parent=39 // pred_check_branch
          %706 = sbr.rel (%p704) target = $region44
        $region43: #{tpu_custom_call.1} parent=39 // pred_region
          %s707 = sand.u32 %s94, 1
          %s708 = scalar_lea.sflag [#allocation3], %s707
          %s709 = sand.u32 %s94, 1
          %s710 = smul.addr %s709, 16
          %s711 = scalar_lea.vmem [#allocation2], %s710
          %712 = dma.done %s708, 256
        $region44: #{tpu_custom_call.1} parent=39 // pred_fallthru
          _
      $region40: #{tpu_custom_call.1} parent=5 // pred_fallthru
        _
    $region6: #{tpu_custom_call.1} parent=1 // loop_footer
      %s16 = sadd.s32 1, %s12
    $region7: #{tpu_custom_call.1} parent=1 // loop_footer_branch
      %11 = sbr.rel target = $region3
    $region8: #{tpu_custom_call.1} parent=1 // loop_exit
      _
    %713 = vsyncpa [#allocation3], 1
    %s714 = scalar_lea.sflag [#allocation3], 1
    %715 = vsyncpa %s714, 1

</llo_original>
